<compile_context>
chip_gen: v7x
topology: tpu7x:2x2x1
jax: 0.10.0
libtpu: 0.0.40
codegen_flags: <defaults>
</compile_context>

<pallas_src>
import functools

import jax
import jax.numpy as jnp
from jax.experimental import pallas as pl
from jax.experimental.pallas import tpu as pltpu


def _round_up(x, m):
    return ((x + m - 1) // m) * m


def _fused_gcn2_kernel(a_ref, x_ref, w1_ref, b1_ref, w2_ref, b2_ref, o_ref):
    """Fused 2-layer GraphConv forward.

    layer 1 (reassociated): X1  = relu((A @ X) @ W1 + rowsum(A)[:, None] * b1)
    layer 2:                out = A @ (X1 @ W2 + b2)        (F_out padded to 128)

    Matmuls run on the MXU in the operands' dtype (bf16 by default) with f32
    accumulation; bias adds and the ReLU are f32 on the VPU.
    """
    f32 = jnp.float32
    a = a_ref[...]
    cdt = a.dtype  # MXU compute dtype (bf16 or f32)

    # ---- layer 1 ----
    ax = jnp.dot(a, x_ref[...], preferred_element_type=f32)                 # (N, F_in)
    d = jnp.sum(a.astype(f32), axis=-1, keepdims=True)                      # rowsum(A), (N, 1)
    h1 = jnp.dot(ax.astype(cdt), w1_ref[...], preferred_element_type=f32)   # (N, H)
    x1 = jnp.maximum(h1 + d * b1_ref[...], 0.0)                             # f32, stays on-chip

    # ---- layer 2 ----
    y2 = jnp.dot(x1.astype(cdt), w2_ref[...], preferred_element_type=f32) + b2_ref[...]
    h2 = jnp.dot(a, y2.astype(cdt), preferred_element_type=f32)             # (N, F_pad)
    o_ref[...] = h2.astype(o_ref.dtype)


def sequential_gcn2_forward(A, X, W1, b1, W2, b2, *, compute_dtype=jnp.bfloat16):
    """Fused forward of Sequential(GraphConv + ReLU, GraphConv) + final squeeze."""
    N = A.shape[0]
    F_in = X.shape[1]
    H = W1.shape[1]
    F_out = W2.shape[1]
    F_pad = _round_up(F_out, 128)  # lane-dense output slab -> unmasked vst

    # Zero-pad the output-feature axis so all final-stage lanes are dense.
    W2p = jnp.pad(W2, ((0, 0), (0, F_pad - F_out)))
    b2p = jnp.pad(b2, ((0, 0), (0, F_pad - F_out)))

    # MXU operands in the (narrow) compute dtype; biases stay f32.
    a = A.astype(compute_dtype)
    x = X.astype(compute_dtype)
    w1 = W1.astype(compute_dtype)
    w2 = W2p.astype(compute_dtype)
    b1f = b1.astype(jnp.float32)
    b2f = b2p.astype(jnp.float32)

    out = pl.pallas_call(
        _fused_gcn2_kernel,
        out_shape=jax.ShapeDtypeStruct((N, F_pad), jnp.float32),
        grid=(1,),
        in_specs=[
            pl.BlockSpec((N, N), lambda i: (0, 0)),       # A
            pl.BlockSpec((N, F_in), lambda i: (0, 0)),    # X
            pl.BlockSpec((F_in, H), lambda i: (0, 0)),    # W1
            pl.BlockSpec((1, H), lambda i: (0, 0)),       # b1
            pl.BlockSpec((H, F_pad), lambda i: (0, 0)),   # W2 (padded)
            pl.BlockSpec((1, F_pad), lambda i: (0, 0)),   # b2 (padded)
        ],
        out_specs=pl.BlockSpec((N, F_pad), lambda i: (0, 0)),
        compiler_params=pltpu.CompilerParams(
            dimension_semantics=("arbitrary",),
        ),
    )(a, x, w1, b1f, w2, b2f)

    # Undo the lane padding, then apply Sequential.forward's final squeeze.
    return jnp.squeeze(out[:, :F_out])


class SequentialPallas:
    """Mirror of numml.nn.Sequential for the 2-layer GraphConv instantiation.

    The generic container loops `X = layer(A, X)` and squeezes; here the whole
    pipeline (both GraphConvs, ReLU, biases, squeeze) is fused into a single
    jitted Pallas kernel so the intermediate activation never touches HBM.
    """

    def __init__(self, W1, b1, W2, b2, *, compute_dtype=jnp.bfloat16):
        self.params = (W1, b1, W2, b2)
        self._fwd = jax.jit(
            functools.partial(sequential_gcn2_forward, compute_dtype=compute_dtype)
        )

    def __call__(self, A, X):
        W1, b1, W2, b2 = self.params
        return self._fwd(A, X, W1, b1, W2, b2)


if __name__ == "__main__":
    # Small deterministic problem: N=16 nodes, F_in=8, hidden=32, F_out=1
    N, F_IN, HIDDEN, F_OUT = 16, 8, 32, 1
    key = jax.random.PRNGKey(0)
    k_a, k_x, k_w1, k_w2 = jax.random.split(key, 4)

    # Dense symmetric "adjacency" with self-loops (stand-in for numml's sparse A).
    A = jax.random.uniform(k_a, (N, N), dtype=jnp.float32)
    A = 0.5 * (A + A.T) + jnp.eye(N, dtype=jnp.float32)

    X = jax.random.normal(k_x, (N, F_IN), dtype=jnp.float32)

    # Deterministic parameter init (synthetic, not a checkpoint load).
    W1 = jax.random.normal(k_w1, (F_IN, HIDDEN), dtype=jnp.float32) * 0.1
    b1 = jnp.full((1, HIDDEN), 0.01, dtype=jnp.float32)
    W2 = jax.random.normal(k_w2, (HIDDEN, F_OUT), dtype=jnp.float32) * 0.1
    b2 = jnp.full((1, F_OUT), 0.01, dtype=jnp.float32)

    # ---- check 1: f32 compute path vs original-order f32 reference ----------
    # Validates the algebra (layer-1 reassociation + rowsum-bias fold + lane
    # padding + squeeze) independently of the bf16 quantization.
    model_f32 = SequentialPallas(W1, b1, W2, b2, compute_dtype=jnp.float32)
    out_f32 = jax.block_until_ready(model_f32(A, X))

    hi = jax.lax.Precision.HIGHEST
    ref = jnp.maximum(jnp.dot(A, jnp.dot(X, W1, precision=hi) + b1, precision=hi), 0.0)
    ref = jnp.dot(A, jnp.dot(ref, W2, precision=hi) + b2, precision=hi)
    ref = jnp.squeeze(ref)

    assert out_f32.shape == (N,), out_f32.shape
    assert jnp.allclose(out_f32, ref, atol=5e-3, rtol=5e-3), "f32 path mismatch vs reference"

    # ---- check 2: default bf16 MXU path vs a mirrored pure-JAX reference ----
    model = SequentialPallas(W1, b1, W2, b2)  # bf16 MXU operands, f32 accumulation
    out = jax.block_until_ready(model(A, X))

    def mirrored_ref(A, X, W1, b1, W2, b2, cdt=jnp.bfloat16):
        f32 = jnp.float32
        a, x = A.astype(cdt), X.astype(cdt)
        w1, w2 = W1.astype(cdt), W2.astype(cdt)
        ax = jnp.dot(a, x, preferred_element_type=f32)
        d = jnp.sum(a.astype(f32), axis=-1, keepdims=True)
        h1 = jnp.dot(ax.astype(cdt), w1, preferred_element_type=f32)
        x1 = jnp.maximum(h1 + d * b1, 0.0)
        y2 = jnp.dot(x1.astype(cdt), w2, preferred_element_type=f32) + b2
        h2 = jnp.dot(a, y2.astype(cdt), preferred_element_type=f32)
        return jnp.squeeze(h2)

    mref = mirrored_ref(A, X, W1, b1, W2, b2)
    assert out.shape == (N,), out.shape
    assert jnp.allclose(out, mref, atol=1e-3, rtol=1e-3), "bf16 path mismatch vs mirrored reference"

    print("KERNEL_OK")
</pallas_src>

<mosaic_0001>
module attributes {stable_mosaic.version = 11 : i64} {
  func.func @_fused_gcn2_kernel(%arg0: i32, %arg1: memref<16x16xf32, #tpu.memory_space<vmem>>, %arg2: memref<16x8xf32, #tpu.memory_space<vmem>>, %arg3: memref<8x32xf32, #tpu.memory_space<vmem>>, %arg4: memref<1x32xf32, #tpu.memory_space<vmem>>, %arg5: memref<32x128xf32, #tpu.memory_space<vmem>>, %arg6: memref<1x128xf32, #tpu.memory_space<vmem>>, %arg7: memref<16x128xf32, #tpu.memory_space<vmem>>) attributes {dimension_semantics = [#tpu.dimension_semantics<arbitrary>], iteration_bounds = array<i64: 1>, scalar_prefetch = 0 : i64, scratch_operands = 0 : i64, tpu.core_type = #tpu.core_type<tc>, window_params = [{pipeline_mode = #tpu.pipeline_mode<synchronous>, transform_indices = @transform_0, window_bounds = array<i64: 16, 16>}, {pipeline_mode = #tpu.pipeline_mode<synchronous>, transform_indices = @transform_1, window_bounds = array<i64: 16, 8>}, {pipeline_mode = #tpu.pipeline_mode<synchronous>, transform_indices = @transform_2, window_bounds = array<i64: 8, 32>}, {pipeline_mode = #tpu.pipeline_mode<synchronous>, transform_indices = @transform_3, window_bounds = array<i64: 1, 32>}, {pipeline_mode = #tpu.pipeline_mode<synchronous>, transform_indices = @transform_4, window_bounds = array<i64: 32, 128>}, {pipeline_mode = #tpu.pipeline_mode<synchronous>, transform_indices = @transform_5, window_bounds = array<i64: 1, 128>}, {pipeline_mode = #tpu.pipeline_mode<synchronous>, transform_indices = @transform_6, window_bounds = array<i64: 16, 128>}]} {
    %c0 = arith.constant 0 : index
    %c0_0 = arith.constant 0 : index
    %0 = vector.load %arg1[%c0, %c0_0] : memref<16x16xf32, #tpu.memory_space<vmem>>, vector<16x16xf32>
    %c0_1 = arith.constant 0 : index
    %c0_2 = arith.constant 0 : index
    %1 = vector.load %arg2[%c0_1, %c0_2] : memref<16x8xf32, #tpu.memory_space<vmem>>, vector<16x8xf32>
    %cst = arith.constant dense<0.000000e+00> : vector<16x8xf32>
    %2 = tpu.matmul %0, %1, %cst {dimension_numbers = #tpu.dot_dimension_numbers<[1], [0], [0], [1], [0, 0, 1, 1], [], []>} : vector<16x16xf32>, vector<16x8xf32>, vector<16x8xf32> -> vector<16x8xf32>
    %cst_3 = arith.constant dense<0.000000e+00> : vector<16xf32>
    %3 = vector.multi_reduction <add>, %0, %cst_3 [1] : vector<16x16xf32> to vector<16xf32>
    %4 = vector.shape_cast %3 : vector<16xf32> to vector<16x1xf32>
    %c0_4 = arith.constant 0 : index
    %c0_5 = arith.constant 0 : index
    %5 = vector.load %arg3[%c0_4, %c0_5] : memref<8x32xf32, #tpu.memory_space<vmem>>, vector<8x32xf32>
    %cst_6 = arith.constant dense<0.000000e+00> : vector<16x32xf32>
    %6 = tpu.matmul %2, %5, %cst_6 {dimension_numbers = #tpu.dot_dimension_numbers<[1], [0], [0], [1], [0, 0, 1, 1], [], []>} : vector<16x8xf32>, vector<8x32xf32>, vector<16x32xf32> -> vector<16x32xf32>
    %c0_7 = arith.constant 0 : index
    %c0_8 = arith.constant 0 : index
    %7 = vector.load %arg4[%c0_7, %c0_8] : memref<1x32xf32, #tpu.memory_space<vmem>>, vector<1x32xf32>
    %8 = vector.broadcast %4 : vector<16x1xf32> to vector<16x32xf32>
    %9 = vector.broadcast %7 : vector<1x32xf32> to vector<16x32xf32>
    %10 = arith.mulf %8, %9 : vector<16x32xf32>
    %11 = arith.addf %6, %10 : vector<16x32xf32>
    %cst_9 = arith.constant 0.000000e+00 : f32
    %12 = vector.broadcast %cst_9 : f32 to vector<16x32xf32>
    %13 = arith.maximumf %11, %12 : vector<16x32xf32>
    %c0_10 = arith.constant 0 : index
    %c0_11 = arith.constant 0 : index
    %14 = vector.load %arg5[%c0_10, %c0_11] : memref<32x128xf32, #tpu.memory_space<vmem>>, vector<32x128xf32>
    %cst_12 = arith.constant dense<0.000000e+00> : vector<16x128xf32>
    %15 = tpu.matmul %13, %14, %cst_12 {dimension_numbers = #tpu.dot_dimension_numbers<[1], [0], [0], [1], [0, 0, 1, 1], [], []>} : vector<16x32xf32>, vector<32x128xf32>, vector<16x128xf32> -> vector<16x128xf32>
    %c0_13 = arith.constant 0 : index
    %c0_14 = arith.constant 0 : index
    %16 = vector.load %arg6[%c0_13, %c0_14] : memref<1x128xf32, #tpu.memory_space<vmem>>, vector<1x128xf32>
    %17 = vector.broadcast %16 : vector<1x128xf32> to vector<16x128xf32>
    %18 = arith.addf %15, %17 : vector<16x128xf32>
    %cst_15 = arith.constant dense<0.000000e+00> : vector<16x128xf32>
    %19 = tpu.matmul %0, %18, %cst_15 {dimension_numbers = #tpu.dot_dimension_numbers<[1], [0], [0], [1], [0, 0, 1, 1], [], []>} : vector<16x16xf32>, vector<16x128xf32>, vector<16x128xf32> -> vector<16x128xf32>
    %c0_16 = arith.constant 0 : index
    %c0_17 = arith.constant 0 : index
    %20 = vector.load %arg7[%c0_16, %c0_17] : memref<16x128xf32, #tpu.memory_space<vmem>>, vector<16x128xf32>
    tpu.vector_store %arg7[%c0_16, %c0_17], %19 {strides = array<i32>} : memref<16x128xf32, #tpu.memory_space<vmem>>, vector<16x128xf32>,
    return
  }
  func.func @transform_0(%arg0: i32) -> (i32, i32) {
    %c0_i32 = arith.constant 0 : i32
    %c0_i32_0 = arith.constant 0 : i32
    %c0_i32_1 = arith.constant 0 : i32
    return %c0_i32, %c0_i32_0 : i32, i32
  }
  func.func @transform_1(%arg0: i32) -> (i32, i32) {
    %c0_i32 = arith.constant 0 : i32
    %c0_i32_0 = arith.constant 0 : i32
    %c0_i32_1 = arith.constant 0 : i32
    return %c0_i32, %c0_i32_0 : i32, i32
  }
  func.func @transform_2(%arg0: i32) -> (i32, i32) {
    %c0_i32 = arith.constant 0 : i32
    %c0_i32_0 = arith.constant 0 : i32
    %c0_i32_1 = arith.constant 0 : i32
    return %c0_i32, %c0_i32_0 : i32, i32
  }
  func.func @transform_3(%arg0: i32) -> (i32, i32) {
    %c0_i32 = arith.constant 0 : i32
    %c0_i32_0 = arith.constant 0 : i32
    %c0_i32_1 = arith.constant 0 : i32
    return %c0_i32, %c0_i32_0 : i32, i32
  }
  func.func @transform_4(%arg0: i32) -> (i32, i32) {
    %c0_i32 = arith.constant 0 : i32
    %c0_i32_0 = arith.constant 0 : i32
    %c0_i32_1 = arith.constant 0 : i32
    return %c0_i32, %c0_i32_0 : i32, i32
  }
  func.func @transform_5(%arg0: i32) -> (i32, i32) {
    %c0_i32 = arith.constant 0 : i32
    %c0_i32_0 = arith.constant 0 : i32
    %c0_i32_1 = arith.constant 0 : i32
    return %c0_i32, %c0_i32_0 : i32, i32
  }
  func.func @transform_6(%arg0: i32) -> (i32, i32) {
    %c0_i32 = arith.constant 0 : i32
    %c0_i32_0 = arith.constant 0 : i32
    %c0_i32_1 = arith.constant 0 : i32
    return %c0_i32, %c0_i32_0 : i32, i32
  }
}

</mosaic_0001>

<llo_original>
// kernel: sequential_gcn2_forward.1
$region0: #{sequential_gcn2_forward.1}
  #allocation0 [shape = 'u32[]', space=smem, size = 0x4, offset = 0x4, fixed_abs, tag = 'smem constant byte address 0x4 - core index']
  #allocation1 [shape = 'u32[144,128]{1,0:T(1,128)}', space=vmem, size = 0x12000, scoped, tag = 'internal scratch']
  %s0 = inlined_call_operand.vmem [shape: f32[16,16], index: 0, kind: input, shape index: {}]
  %s1 = inlined_call_operand.vmem [shape: f32[16,8], index: 1, kind: input, shape index: {}]
  %s2 = inlined_call_operand.vmem [shape: f32[8,32], index: 2, kind: input, shape index: {}]
  %s3 = inlined_call_operand.vmem [shape: f32[1,32], index: 3, kind: input, shape index: {}]
  %s4 = inlined_call_operand.vmem [shape: f32[32,128], index: 4, kind: input, shape index: {}]
  %s5 = inlined_call_operand.vmem [shape: f32[1,128], index: 5, kind: input, shape index: {}]
  %s6 = inlined_call_operand.vmem [shape: f32[16,128], index: 6, kind: output, shape index: {}]
  %s7 = sld [smem:[#allocation0]]
  $region34: #{sequential_gcn2_forward.1} parent=0
    _
  %s9 = ssub.s32 1, %s7
  %s10 = scalar_select 0, %s9, %s7
  // Predicated region
  $region2: #{sequential_gcn2_forward.1} parent=0 // pred_check
    _
  $region3: #{sequential_gcn2_forward.1} parent=0 // pred_check_branch
    %12 = sbr.rel (0) target = $region5
  $region4: #{sequential_gcn2_forward.1} parent=0 // pred_region
    _
  $region5: #{sequential_gcn2_forward.1} parent=0 // pred_fallthru
    _
  // Predicated region
  $region6: #{sequential_gcn2_forward.1} parent=0 // pred_check
    _
  $region7: #{sequential_gcn2_forward.1} parent=0 // pred_check_branch
    %14 = sbr.rel (0) target = $region9
  $region8: #{sequential_gcn2_forward.1} parent=0 // pred_region
    _
  $region9: #{sequential_gcn2_forward.1} parent=0 // pred_fallthru
    _
  // Predicated region
  $region10: #{sequential_gcn2_forward.1} parent=0 // pred_check
    _
  $region11: #{sequential_gcn2_forward.1} parent=0 // pred_check_branch
    %16 = sbr.rel (0) target = $region13
  $region12: #{sequential_gcn2_forward.1} parent=0 // pred_region
    _
  $region13: #{sequential_gcn2_forward.1} parent=0 // pred_fallthru
    _
  // Predicated region
  $region14: #{sequential_gcn2_forward.1} parent=0 // pred_check
    _
  $region15: #{sequential_gcn2_forward.1} parent=0 // pred_check_branch
    %18 = sbr.rel (0) target = $region17
  $region16: #{sequential_gcn2_forward.1} parent=0 // pred_region
    _
  $region17: #{sequential_gcn2_forward.1} parent=0 // pred_fallthru
    _
  // Predicated region
  $region18: #{sequential_gcn2_forward.1} parent=0 // pred_check
    _
  $region19: #{sequential_gcn2_forward.1} parent=0 // pred_check_branch
    %20 = sbr.rel (0) target = $region21
  $region20: #{sequential_gcn2_forward.1} parent=0 // pred_region
    _
  $region21: #{sequential_gcn2_forward.1} parent=0 // pred_fallthru
    _
  // Predicated region
  $region22: #{sequential_gcn2_forward.1} parent=0 // pred_check
    _
  $region23: #{sequential_gcn2_forward.1} parent=0 // pred_check_branch
    %22 = sbr.rel (0) target = $region25
  $region24: #{sequential_gcn2_forward.1} parent=0 // pred_region
    _
  $region25: #{sequential_gcn2_forward.1} parent=0 // pred_fallthru
    _
  %v23 = vld [vmem:[%s0] sm:$0xff]
  %v24 = vld [vmem:[%s0 + $0x8] sm:$0xff]
  %v25 = vld [vmem:[%s1] sm:$0xff]
  %v26 = vld [vmem:[%s1 + $0x8] sm:$0xff]
  %vm27 = vcmask 130048
  %v29 = vsel %vm27, %v23, 0
  %v32 = vsel %vm27, %v24, 0
  %34 = vmatprep.subr.mxu0 0.0
  %35 = vmatpush1.msra.mxu0 %v25
  %36 = vmatprep.subr.mxu0 0.0
  %37 = vmatpush1.msra.mxu0 %v26
  %38 = vmatprep.subr.mxu0 0.0
  %39 = vmatpush1.msra.mxu0 0.0
  %40 = vmatprep.subr.mxu0 0.0
  %41 = vmatpush1.msra.mxu0 0.0
  %42 = vmatprep.subr.mxu0 0.0
  %43 = vmatpush1.msra.mxu0 0.0
  %44 = vmatprep.subr.mxu0 0.0
  %45 = vmatpush1.msra.mxu0 0.0
  %46 = vmatprep.subr.mxu0 0.0
  %47 = vmatpush1.msra.mxu0 0.0
  %48 = vmatprep.subr.mxu0 0.0
  %49 = vmatpush1.msra.mxu0 0.0
  %50 = vmatprep.subr.mxu0 0.0
  %51 = vmatpush1.msra.mxu0 0.0
  %52 = vmatprep.subr.mxu0 0.0
  %53 = vmatpush1.msra.mxu0 0.0
  %54 = vmatprep.subr.mxu0 0.0
  %55 = vmatpush1.msra.mxu0 0.0
  %56 = vmatprep.subr.mxu0 0.0
  %57 = vmatpush1.msra.mxu0 0.0
  %58 = vmatprep.subr.mxu0 0.0
  %59 = vmatpush1.msra.mxu0 0.0
  %60 = vmatprep.subr.mxu0 0.0
  %61 = vmatpush1.msra.mxu0 0.0
  %62 = vmatprep.subr.mxu0 0.0
  %63 = vmatpush1.msra.mxu0 0.0
  %64 = vmatprep.subr.mxu0 0.0
  %65 = vmatpush1.msra.mxu0 0.0
  %66 = vmatprep.subr.mxu0 0.0
  %67 = vmatpush1.msra.mxu0 0.0
  %68 = vmatprep.subr.mxu0 0.0
  %69 = vmatpush1.msra.mxu0 0.0
  %70 = vmatprep.subr.mxu0 0.0
  %71 = vmatpush1.msra.mxu0 0.0
  %72 = vmatprep.subr.mxu0 0.0
  %73 = vmatpush1.msra.mxu0 0.0
  %74 = vmatprep.subr.mxu0 0.0
  %75 = vmatpush1.msra.mxu0 0.0
  %76 = vmatprep.subr.mxu0 0.0
  %77 = vmatpush1.msra.mxu0 0.0
  %78 = vmatprep.subr.mxu0 0.0
  %79 = vmatpush1.msra.mxu0 0.0
  %80 = vmatprep.subr.mxu0 0.0
  %81 = vmatpush1.msra.mxu0 0.0
  %82 = vmatprep.subr.mxu0 0.0
  %83 = vmatpush1.msra.mxu0 0.0
  %84 = vmatprep.subr.mxu0 0.0
  %85 = vmatpush1.msra.mxu0 0.0
  %86 = vmatprep.subr.mxu0 0.0
  %87 = vmatpush1.msra.mxu0 0.0
  %88 = vmatprep.subr.mxu0 0.0
  %89 = vmatpush1.msra.mxu0 0.0
  %90 = vmatprep.subr.mxu0 0.0
  %91 = vmatpush1.msra.mxu0 0.0
  %92 = vmatprep.subr.mxu0 0.0
  %93 = vmatpush1.msra.mxu0 0.0
  %94 = vmatprep.subr.mxu0 0.0
  %95 = vmatpush1.msra.mxu0 0.0
  %96 = vmatprep.subr.mxu0 0.0
  %97 = vmatpush1.msra.mxu0 0.0
  %98 = vmatprep.mubr.f32.mxu0 0.0
  %99 = vmatmul.mubr.f32.gmra.mrb[0].mxu0 %v29
  %v100 = vpop.f32.mrb[0].mxu0
  %v101 = vadd.f32 0.0, %v100
  %v102 = vpop.f32.mrb[0].mxu0
  %103 = vmatprep.mubr.f32.mxu0 0.0
  %104 = vmatmul.mubr.f32.gmra.mrb[0].mxu0 %v32
  %v105 = vpop.f32.mrb[0].mxu0
  %v106 = vadd.f32 0.0, %v105
  %v107 = vpop.f32.mrb[0].mxu0
  %108 = vdwg.mxu0
  %v109 = vsel %vm27, %v23, 0.0
  %110 = vadd.xlane.f32.xlu0 %v109
  %v111 = vpop.xlane.xlu0 %110
  %v112 = vsel %vm27, %v24, 0.0
  %113 = vadd.xlane.f32.xlu0 %v112
  %v114 = vpop.xlane.xlu0 %113
  %v115 = vld [vmem:[%s2] sm:$0xff]
  %v116 = vld [vmem:[%s3] sm:$0x1]
  %v118 = vlaneseq
  %v119 = vshrl.u32 %v118, 7
  %v120 = vsub.s32 0, %v119
  %v121 = vrot.slane %v116, %v120
  %v123 = vmul.f32 %v111, %v121
  %v124 = vmul.f32 %v114, %v121
  %vm125 = vcmask 64512
  %v127 = vsel %vm125, %v101, 0
  %v130 = vsel %vm125, %v106, 0
  %132 = vmatprep.subr.mxu0 0.0
  %133 = vmatpush1.msra.mxu0 %v115
  %134 = vmatprep.subr.mxu0 0.0
  %135 = vmatpush1.msra.mxu0 0.0
  %136 = vmatprep.subr.mxu0 0.0
  %137 = vmatpush1.msra.mxu0 0.0
  %138 = vmatprep.subr.mxu0 0.0
  %139 = vmatpush1.msra.mxu0 0.0
  %140 = vmatprep.subr.mxu0 0.0
  %141 = vmatpush1.msra.mxu0 0.0
  %142 = vmatprep.subr.mxu0 0.0
  %143 = vmatpush1.msra.mxu0 0.0
  %144 = vmatprep.subr.mxu0 0.0
  %145 = vmatpush1.msra.mxu0 0.0
  %146 = vmatprep.subr.mxu0 0.0
  %147 = vmatpush1.msra.mxu0 0.0
  %148 = vmatprep.subr.mxu0 0.0
  %149 = vmatpush1.msra.mxu0 0.0
  %150 = vmatprep.subr.mxu0 0.0
  %151 = vmatpush1.msra.mxu0 0.0
  %152 = vmatprep.subr.mxu0 0.0
  %153 = vmatpush1.msra.mxu0 0.0
  %154 = vmatprep.subr.mxu0 0.0
  %155 = vmatpush1.msra.mxu0 0.0
  %156 = vmatprep.subr.mxu0 0.0
  %157 = vmatpush1.msra.mxu0 0.0
  %158 = vmatprep.subr.mxu0 0.0
  %159 = vmatpush1.msra.mxu0 0.0
  %160 = vmatprep.subr.mxu0 0.0
  %161 = vmatpush1.msra.mxu0 0.0
  %162 = vmatprep.subr.mxu0 0.0
  %163 = vmatpush1.msra.mxu0 0.0
  %164 = vmatprep.subr.mxu0 0.0
  %165 = vmatpush1.msra.mxu0 0.0
  %166 = vmatprep.subr.mxu0 0.0
  %167 = vmatpush1.msra.mxu0 0.0
  %168 = vmatprep.subr.mxu0 0.0
  %169 = vmatpush1.msra.mxu0 0.0
  %170 = vmatprep.subr.mxu0 0.0
  %171 = vmatpush1.msra.mxu0 0.0
  %172 = vmatprep.subr.mxu0 0.0
  %173 = vmatpush1.msra.mxu0 0.0
  %174 = vmatprep.subr.mxu0 0.0
  %175 = vmatpush1.msra.mxu0 0.0
  %176 = vmatprep.subr.mxu0 0.0
  %177 = vmatpush1.msra.mxu0 0.0
  %178 = vmatprep.subr.mxu0 0.0
  %179 = vmatpush1.msra.mxu0 0.0
  %180 = vmatprep.subr.mxu0 0.0
  %181 = vmatpush1.msra.mxu0 0.0
  %182 = vmatprep.subr.mxu0 0.0
  %183 = vmatpush1.msra.mxu0 0.0
  %184 = vmatprep.subr.mxu0 0.0
  %185 = vmatpush1.msra.mxu0 0.0
  %186 = vmatprep.subr.mxu0 0.0
  %187 = vmatpush1.msra.mxu0 0.0
  %188 = vmatprep.subr.mxu0 0.0
  %189 = vmatpush1.msra.mxu0 0.0
  %190 = vmatprep.subr.mxu0 0.0
  %191 = vmatpush1.msra.mxu0 0.0
  %192 = vmatprep.subr.mxu0 0.0
  %193 = vmatpush1.msra.mxu0 0.0
  %194 = vmatprep.subr.mxu0 0.0
  %195 = vmatpush1.msra.mxu0 0.0
  %196 = vmatprep.mubr.f32.mxu0 0.0
  %197 = vmatmul.mubr.f32.gmra.mrb[0].mxu0 %v127
  %v198 = vpop.f32.mrb[0].mxu0
  %v199 = vadd.f32 %v123, %v198
  %v200 = vpop.f32.mrb[0].mxu0
  %201 = vmatprep.mubr.f32.mxu0 0.0
  %202 = vmatmul.mubr.f32.gmra.mrb[0].mxu0 %v130
  %v203 = vpop.f32.mrb[0].mxu0
  %v204 = vadd.f32 %v124, %v203
  %v205 = vpop.f32.mrb[0].mxu0
  %206 = vdwg.mxu0
  %v207 = vmax.f32 %v199, 0.0
  %v208 = vmax.f32 %v204, 0.0
  %v209 = vld [vmem:[%s4] sm:$0xff]
  %v210 = vld [vmem:[%s4 + $0x8] sm:$0xff]
  %v211 = vld [vmem:[%s4 + $0x10] sm:$0xff]
  %v212 = vld [vmem:[%s4 + $0x18] sm:$0xff]
  %v213 = vld [vmem:[%s5] sm:$0x1]
  %v215 = vlaneseq
  %v216 = vshrl.u32 %v215, 7
  %v217 = vsub.s32 0, %v216
  %v218 = vrot.slane %v213, %v217
  %vm220 = vcmask 261120
  %v222 = vsel %vm220, %v207, 0
  %v225 = vsel %vm220, %v208, 0
  %227 = vmatprep.subr.mxu0 0.0
  %228 = vmatpush1.msra.mxu0 %v209
  %229 = vmatprep.subr.mxu0 0.0
  %230 = vmatpush1.msra.mxu0 %v210
  %231 = vmatprep.subr.mxu0 0.0
  %232 = vmatpush1.msra.mxu0 %v211
  %233 = vmatprep.subr.mxu0 0.0
  %234 = vmatpush1.msra.mxu0 %v212
  %235 = vmatprep.subr.mxu0 0.0
  %236 = vmatpush1.msra.mxu0 0.0
  %237 = vmatprep.subr.mxu0 0.0
  %238 = vmatpush1.msra.mxu0 0.0
  %239 = vmatprep.subr.mxu0 0.0
  %240 = vmatpush1.msra.mxu0 0.0
  %241 = vmatprep.subr.mxu0 0.0
  %242 = vmatpush1.msra.mxu0 0.0
  %243 = vmatprep.subr.mxu0 0.0
  %244 = vmatpush1.msra.mxu0 0.0
  %245 = vmatprep.subr.mxu0 0.0
  %246 = vmatpush1.msra.mxu0 0.0
  %247 = vmatprep.subr.mxu0 0.0
  %248 = vmatpush1.msra.mxu0 0.0
  %249 = vmatprep.subr.mxu0 0.0
  %250 = vmatpush1.msra.mxu0 0.0
  %251 = vmatprep.subr.mxu0 0.0
  %252 = vmatpush1.msra.mxu0 0.0
  %253 = vmatprep.subr.mxu0 0.0
  %254 = vmatpush1.msra.mxu0 0.0
  %255 = vmatprep.subr.mxu0 0.0
  %256 = vmatpush1.msra.mxu0 0.0
  %257 = vmatprep.subr.mxu0 0.0
  %258 = vmatpush1.msra.mxu0 0.0
  %259 = vmatprep.subr.mxu0 0.0
  %260 = vmatpush1.msra.mxu0 0.0
  %261 = vmatprep.subr.mxu0 0.0
  %262 = vmatpush1.msra.mxu0 0.0
  %263 = vmatprep.subr.mxu0 0.0
  %264 = vmatpush1.msra.mxu0 0.0
  %265 = vmatprep.subr.mxu0 0.0
  %266 = vmatpush1.msra.mxu0 0.0
  %267 = vmatprep.subr.mxu0 0.0
  %268 = vmatpush1.msra.mxu0 0.0
  %269 = vmatprep.subr.mxu0 0.0
  %270 = vmatpush1.msra.mxu0 0.0
  %271 = vmatprep.subr.mxu0 0.0
  %272 = vmatpush1.msra.mxu0 0.0
  %273 = vmatprep.subr.mxu0 0.0
  %274 = vmatpush1.msra.mxu0 0.0
  %275 = vmatprep.subr.mxu0 0.0
  %276 = vmatpush1.msra.mxu0 0.0
  %277 = vmatprep.subr.mxu0 0.0
  %278 = vmatpush1.msra.mxu0 0.0
  %279 = vmatprep.subr.mxu0 0.0
  %280 = vmatpush1.msra.mxu0 0.0
  %281 = vmatprep.subr.mxu0 0.0
  %282 = vmatpush1.msra.mxu0 0.0
  %283 = vmatprep.subr.mxu0 0.0
  %284 = vmatpush1.msra.mxu0 0.0
  %285 = vmatprep.subr.mxu0 0.0
  %286 = vmatpush1.msra.mxu0 0.0
  %287 = vmatprep.subr.mxu0 0.0
  %288 = vmatpush1.msra.mxu0 0.0
  %289 = vmatprep.subr.mxu0 0.0
  %290 = vmatpush1.msra.mxu0 0.0
  %291 = vmatprep.mubr.f32.mxu0 0.0
  %292 = vmatmul.mubr.f32.gmra.mrb[0].mxu0 %v222
  %v293 = vpop.f32.mrb[0].mxu0
  %v294 = vadd.f32 %v218, %v293
  %v295 = vpop.f32.mrb[0].mxu0
  %296 = vmatprep.mubr.f32.mxu0 0.0
  %297 = vmatmul.mubr.f32.gmra.mrb[0].mxu0 %v225
  %v298 = vpop.f32.mrb[0].mxu0
  %v299 = vadd.f32 %v218, %v298
  %v300 = vpop.f32.mrb[0].mxu0
  %301 = vdwg.mxu0
  %302 = vmatprep.subr.mxu0 0.0
  %303 = vmatpush1.msra.mxu0 %v294
  %304 = vmatprep.subr.mxu0 0.0
  %305 = vmatpush1.msra.mxu0 %v299
  %306 = vmatprep.subr.mxu0 0.0
  %307 = vmatpush1.msra.mxu0 0.0
  %308 = vmatprep.subr.mxu0 0.0
  %309 = vmatpush1.msra.mxu0 0.0
  %310 = vmatprep.subr.mxu0 0.0
  %311 = vmatpush1.msra.mxu0 0.0
  %312 = vmatprep.subr.mxu0 0.0
  %313 = vmatpush1.msra.mxu0 0.0
  %314 = vmatprep.subr.mxu0 0.0
  %315 = vmatpush1.msra.mxu0 0.0
  %316 = vmatprep.subr.mxu0 0.0
  %317 = vmatpush1.msra.mxu0 0.0
  %318 = vmatprep.subr.mxu0 0.0
  %319 = vmatpush1.msra.mxu0 0.0
  %320 = vmatprep.subr.mxu0 0.0
  %321 = vmatpush1.msra.mxu0 0.0
  %322 = vmatprep.subr.mxu0 0.0
  %323 = vmatpush1.msra.mxu0 0.0
  %324 = vmatprep.subr.mxu0 0.0
  %325 = vmatpush1.msra.mxu0 0.0
  %326 = vmatprep.subr.mxu0 0.0
  %327 = vmatpush1.msra.mxu0 0.0
  %328 = vmatprep.subr.mxu0 0.0
  %329 = vmatpush1.msra.mxu0 0.0
  %330 = vmatprep.subr.mxu0 0.0
  %331 = vmatpush1.msra.mxu0 0.0
  %332 = vmatprep.subr.mxu0 0.0
  %333 = vmatpush1.msra.mxu0 0.0
  %334 = vmatprep.subr.mxu0 0.0
  %335 = vmatpush1.msra.mxu0 0.0
  %336 = vmatprep.subr.mxu0 0.0
  %337 = vmatpush1.msra.mxu0 0.0
  %338 = vmatprep.subr.mxu0 0.0
  %339 = vmatpush1.msra.mxu0 0.0
  %340 = vmatprep.subr.mxu0 0.0
  %341 = vmatpush1.msra.mxu0 0.0
  %342 = vmatprep.subr.mxu0 0.0
  %343 = vmatpush1.msra.mxu0 0.0
  %344 = vmatprep.subr.mxu0 0.0
  %345 = vmatpush1.msra.mxu0 0.0
  %346 = vmatprep.subr.mxu0 0.0
  %347 = vmatpush1.msra.mxu0 0.0
  %348 = vmatprep.subr.mxu0 0.0
  %349 = vmatpush1.msra.mxu0 0.0
  %350 = vmatprep.subr.mxu0 0.0
  %351 = vmatpush1.msra.mxu0 0.0
  %352 = vmatprep.subr.mxu0 0.0
  %353 = vmatpush1.msra.mxu0 0.0
  %354 = vmatprep.subr.mxu0 0.0
  %355 = vmatpush1.msra.mxu0 0.0
  %356 = vmatprep.subr.mxu0 0.0
  %357 = vmatpush1.msra.mxu0 0.0
  %358 = vmatprep.subr.mxu0 0.0
  %359 = vmatpush1.msra.mxu0 0.0
  %360 = vmatprep.subr.mxu0 0.0
  %361 = vmatpush1.msra.mxu0 0.0
  %362 = vmatprep.subr.mxu0 0.0
  %363 = vmatpush1.msra.mxu0 0.0
  %364 = vmatprep.subr.mxu0 0.0
  %365 = vmatpush1.msra.mxu0 0.0
  %366 = vmatprep.mubr.f32.mxu0 0.0
  %367 = vmatmul.mubr.f32.gmra.mrb[0].mxu0 %v29
  %v368 = vpop.f32.mrb[0].mxu0
  %v369 = vadd.f32 0.0, %v368
  %v370 = vpop.f32.mrb[0].mxu0
  %371 = vmatprep.mubr.f32.mxu0 0.0
  %372 = vmatmul.mubr.f32.gmra.mrb[0].mxu0 %v32
  %v373 = vpop.f32.mrb[0].mxu0
  %v374 = vadd.f32 0.0, %v373
  %v375 = vpop.f32.mrb[0].mxu0
  %376 = vdwg.mxu0
  %377 = vst [vmem:[%s6] sm:$0xff] %v369
  %378 = vst [vmem:[%s6 + $0x8] sm:$0xff] %v374
  // Predicated region
  $region26: #{sequential_gcn2_forward.1} parent=0 // pred_check
    _
  $region27: #{sequential_gcn2_forward.1} parent=0 // pred_check_branch
    %380 = sbr.rel (0) target = $region29
  $region28: #{sequential_gcn2_forward.1} parent=0 // pred_region
    _
  $region29: #{sequential_gcn2_forward.1} parent=0 // pred_fallthru
    _
  // Predicated region
  $region30: #{sequential_gcn2_forward.1} parent=0 // pred_check
    _
  $region31: #{sequential_gcn2_forward.1} parent=0 // pred_check_branch
    %382 = sbr.rel (0) target = $region33
  $region32: #{sequential_gcn2_forward.1} parent=0 // pred_region
    _
  $region33: #{sequential_gcn2_forward.1} parent=0 // pred_fallthru
    _

</llo_original>
